<compile_context>
chip_gen: v7x
topology: tpu7x:2x2x1
jax: 0.10.0
libtpu: 0.0.40
codegen_flags: <defaults>
</compile_context>

<pallas_src>
import jax
import jax.numpy as jnp
from jax.experimental import pallas as pl
from jax.experimental.pallas import tpu as pltpu

_LANES = 128


# --------------------------------------------------------------------------
# Fused kernel: adj fully VMEM-resident, one HBM pass over adj, one launch.
#   out = adj @ (relu((adj @ x) @ W1 + b1) @ W_heads) + b_heads
# --------------------------------------------------------------------------
def _fused_kernel(adj_ref, x_ref, w1_ref, b1_ref, wh_ref, bh_ref, out_ref):
    adj = adj_ref[...]                                                  # [N, N] bf16
    ax = jnp.dot(adj, x_ref[...], preferred_element_type=jnp.float32)  # [N, F]  f32
    h = jnp.maximum(
        jnp.dot(ax, w1_ref[...], preferred_element_type=jnp.float32) + b1_ref[...],
        0.0)                                                            # [N, nhid] f32
    t = jnp.dot(h, wh_ref[...],
                preferred_element_type=jnp.float32).astype(jnp.bfloat16)  # [N, 128]
    out = jnp.dot(adj, t, preferred_element_type=jnp.float32) + bh_ref[...]
    out_ref[...] = out.astype(out_ref.dtype)


# --------------------------------------------------------------------------
# Streamed path, stage 1: per adj row tile,
#   t = relu((adj_tile @ x) @ W1 + b1) @ W_heads          (bf16, 128 lanes)
# --------------------------------------------------------------------------
def _gc1_proj_kernel(adj_ref, x_ref, w1_ref, b1_ref, wh_ref, t_ref):
    ax = jnp.dot(adj_ref[...], x_ref[...], preferred_element_type=jnp.float32)
    h = jnp.maximum(
        jnp.dot(ax, w1_ref[...], preferred_element_type=jnp.float32) + b1_ref[...],
        0.0)
    t_ref[...] = jnp.dot(h, wh_ref[...],
                         preferred_element_type=jnp.float32).astype(t_ref.dtype)


# --------------------------------------------------------------------------
# Streamed path, stage 2: per adj row tile,   out = adj_tile @ t + b_heads
# --------------------------------------------------------------------------
def _adj_heads_kernel(adj_ref, t_ref, bh_ref, out_ref):
    out = jnp.dot(adj_ref[...], t_ref[...], preferred_element_type=jnp.float32)
    out_ref[...] = (out + bh_ref[...]).astype(out_ref.dtype)


# --------------------------------------------------------------------------
# Per-chip VMEM budget and budget-driven row-tile picker.
# --------------------------------------------------------------------------
def _vmem_budget_bytes():
    # Leave headroom for Mosaic internals.  v7x: 64 MiB physical -> ~48 MiB;
    # v5e/v6e: 128 MiB physical -> capped at 96 MiB (default scoped limits are
    # lower, so vmem_limit_bytes is set explicitly on every call).
    try:
        cap = int(pltpu.get_tpu_info().vmem_capacity_bytes)
    except Exception:
        cap = 64 << 20
    return int(min(cap * 3 // 4, 96 << 20))


def _pick_row_tile(n_rows, n_cols, out_w, resident_bytes, budget):
    # Per-row cost: adj double-buffer (bf16) + stage-1 (bf16) / stage-2 (f32)
    # output double-buffers.  Residents (x, weights, t) are subtracted first.
    per_row = 2 * n_cols * 2 + 2 * out_w * 4 + 2 * out_w * 2
    usable = int(budget * 0.85) - resident_bytes
    tm = max(8, usable // max(per_row, 1))
    tm = min(tm, n_rows)
    # Guarantee >= 2 row tiles so ("parallel",) actually shards v7x's two TCs.
    if n_rows >= 16:
        tm = min(tm, -(-n_rows // 2))
    if tm >= _LANES:
        tm = (tm // _LANES) * _LANES
    else:
        tm = max(8, (tm // 8) * 8)
    return tm


# --------------------------------------------------------------------------
# Forward
# --------------------------------------------------------------------------
def vencoder_forward(x, adj, params, *, force_streamed=False):
    """x: [N, F]; adj: [N, N] (ship as bf16 persistently -- casting here would
    add a full HBM round-trip over the dominant N^2 operand); params: output of
    pack_params."""
    N, F = x.shape
    nhid = params["w1"].shape[1]
    latent = int(params["latent_dim"])
    pad_w = params["w_heads"].shape[1]          # head width padded to 128 lanes

    if adj.dtype != jnp.bfloat16:
        adj = adj.astype(jnp.bfloat16)          # fallback only; prefer bf16 input
    x_bf = x.astype(jnp.bfloat16)               # tiny (N x F)

    budget = _vmem_budget_bytes()
    full = lambda shape: pl.BlockSpec(shape, lambda i: (0, 0))
    row_tiled = lambda shape: pl.BlockSpec(shape, lambda i: (i, 0))

    w_bytes = (params["w1"].size + params["b1"].size
               + params["w_heads"].size + params["b_heads"].size) * 4
    x_bytes = N * F * 2

    # Rough fused-path residency: adj + x + weights + out (x2 for buffering)
    # plus in-kernel f32 temporaries (ax, h, t, accumulator).
    fused_est = (2 * (N * N * 2 + x_bytes + w_bytes + N * pad_w * 4)
                 + N * (F + nhid + 2 * pad_w) * 4 + N * pad_w * 2)

    if not force_streamed and fused_est <= int(budget * 0.8):
        # ---- fused: adj VMEM-resident, single HBM pass, single launch ------
        out = pl.pallas_call(
            _fused_kernel,
            out_shape=jax.ShapeDtypeStruct((N, pad_w), jnp.float32),
            grid_spec=pltpu.PrefetchScalarGridSpec(
                num_scalar_prefetch=0,
                grid=(1,),
                in_specs=[
                    full((N, N)),           # adj (resident, bf16)
                    full((N, F)),           # x (bf16)
                    full((F, nhid)),        # W1 (f32, tiny)
                    full((1, nhid)),        # b1
                    full((nhid, pad_w)),    # packed+padded head weights (f32)
                    full((1, pad_w)),       # packed+padded head bias
                ],
                out_specs=full((N, pad_w)),
            ),
            compiler_params=pltpu.CompilerParams(
                dimension_semantics=("arbitrary",),
                vmem_limit_bytes=budget),
        )(adj, x_bf, params["w1"], params["b1"],
          params["w_heads"], params["b_heads"])
    else:
        # ---- streamed: row-tile adj through a double-buffered pipeline -----
        resident = 2 * (x_bytes + w_bytes + N * pad_w * 2)   # x, weights, t
        tm = _pick_row_tile(N, N, pad_w, resident, budget)
        n_tiles = int(pl.cdiv(N, tm))
        n_pad = n_tiles * tm
        adj_p = adj if n_pad == N else jnp.pad(adj, ((0, n_pad - N), (0, 0)))

        cparams = pltpu.CompilerParams(
            dimension_semantics=("parallel",),
            vmem_limit_bytes=budget)

        t = pl.pallas_call(
            _gc1_proj_kernel,
            out_shape=jax.ShapeDtypeStruct((n_pad, pad_w), jnp.bfloat16),
            grid_spec=pltpu.PrefetchScalarGridSpec(
                num_scalar_prefetch=0,
                grid=(n_tiles,),
                in_specs=[
                    row_tiled((tm, N)),     # adj row tile (streamed, pipelined)
                    full((N, F)),
                    full((F, nhid)),
                    full((1, nhid)),
                    full((nhid, pad_w)),
                ],
                out_specs=row_tiled((tm, pad_w)),
            ),
            compiler_params=cparams,
        )(adj_p, x_bf, params["w1"], params["b1"], params["w_heads"])

        if n_pad != N:
            t = t[:N]

        out = pl.pallas_call(
            _adj_heads_kernel,
            out_shape=jax.ShapeDtypeStruct((n_pad, pad_w), jnp.float32),
            grid_spec=pltpu.PrefetchScalarGridSpec(
                num_scalar_prefetch=0,
                grid=(n_tiles,),
                in_specs=[
                    row_tiled((tm, N)),     # adj row tile (second HBM pass)
                    full((N, pad_w)),       # t (resident, bf16)
                    full((1, pad_w)),
                ],
                out_specs=row_tiled((tm, pad_w)),
            ),
            compiler_params=cparams,
        )(adj_p, t, params["b_heads"])
        if n_pad != N:
            out = out[:N]

    mu = out[:, :latent]
    logvar = out[:, latent:2 * latent]
    return mu, logvar


# --------------------------------------------------------------------------
# Parameters / inputs / references
# --------------------------------------------------------------------------
def _glorot(key, fan_in, fan_out):
    limit = jnp.sqrt(6.0 / (fan_in + fan_out))
    return jax.random.uniform(key, (fan_in, fan_out), jnp.float32, -limit, limit)


def make_params(key, num_features, nhid, latent_dim):
    k1, k2, k3 = jax.random.split(key, 3)
    return {
        "w1": _glorot(k1, num_features, nhid),
        "b1": jnp.zeros((1, nhid), jnp.float32),
        "wmu": _glorot(k2, nhid, latent_dim),
        "bmu": jnp.zeros((1, latent_dim), jnp.float32),
        "wlv": _glorot(k3, nhid, latent_dim),
        "blv": jnp.zeros((1, latent_dim), jnp.float32),
    }


def pack_params(p):
    """One-time packing/padding (hoisted out of the per-forward path): mu/logvar
    heads are concatenated and zero-padded to 128 output lanes so kernel stores
    are lane-dense; the padding is sliced off in the wrapper."""
    nhid = p["w1"].shape[1]
    latent = p["wmu"].shape[1]
    two_l = 2 * latent
    pad_w = max(_LANES, -(-two_l // _LANES) * _LANES)
    w_heads = jnp.zeros((nhid, pad_w), jnp.float32)
    w_heads = w_heads.at[:, :latent].set(p["wmu"]).at[:, latent:two_l].set(p["wlv"])
    b_heads = jnp.zeros((1, pad_w), jnp.float32)
    b_heads = b_heads.at[:, :latent].set(p["bmu"]).at[:, latent:two_l].set(p["blv"])
    return {"w1": p["w1"], "b1": p["b1"],
            "w_heads": w_heads, "b_heads": b_heads, "latent_dim": latent}


def make_adj(key, n_nodes):
    # deterministic random graph -> symmetric normalized adjacency w/ self loops
    a = (jax.random.uniform(key, (n_nodes, n_nodes)) > 0.7).astype(jnp.float32)
    a = jnp.maximum(a, a.T)
    a = a + jnp.eye(n_nodes, dtype=jnp.float32)
    deg = jnp.sum(a, axis=1)
    d_inv_sqrt = 1.0 / jnp.sqrt(deg)
    return a * d_inv_sqrt[:, None] * d_inv_sqrt[None, :]


def reference_f32(x, adj, p):
    h = jnp.maximum(adj @ (x @ p["w1"]) + p["b1"], 0.0)
    mu = adj @ (h @ p["wmu"]) + p["bmu"]
    lv = adj @ (h @ p["wlv"]) + p["blv"]
    return mu, lv


def reference_kernel_dataflow(x, adj, p):
    """Mirrors the kernels' dtype dataflow: bf16 adj/x/t, f32 everywhere else."""
    f32 = jnp.float32
    latent = p["wmu"].shape[1]
    adj_bf = adj.astype(jnp.bfloat16)
    x_bf = x.astype(jnp.bfloat16)
    wh = jnp.concatenate([p["wmu"], p["wlv"]], axis=1)
    bh = jnp.concatenate([p["bmu"], p["blv"]], axis=1)
    ax = jnp.dot(adj_bf, x_bf, preferred_element_type=f32)
    h = jnp.maximum(jnp.dot(ax, p["w1"], preferred_element_type=f32) + p["b1"], 0.0)
    t = jnp.dot(h, wh, preferred_element_type=f32).astype(jnp.bfloat16)
    out = jnp.dot(adj_bf, t, preferred_element_type=f32) + bh
    return out[:, :latent], out[:, latent:]


if __name__ == "__main__":
    key = jax.random.PRNGKey(0)
    k_x, k_adj, k_p = jax.random.split(key, 3)

    N, NUM_FEATURES, NHID, LATENT = 256, 16, 32, 8

    x = jax.random.normal(k_x, (N, NUM_FEATURES), jnp.float32)
    adj = make_adj(k_adj, N)
    raw = make_params(k_p, NUM_FEATURES, NHID, LATENT)
    params = pack_params(raw)            # hoisted: packed/padded once, not per call
    adj_bf = adj.astype(jnp.bfloat16)    # hoisted: adj shipped as bf16 persistently

    # Fused (adj VMEM-resident) path -- the one selected at this problem size.
    mu, logvar = jax.block_until_ready(vencoder_forward(x, adj_bf, params))
    # Streamed two-stage path (exercised explicitly for coverage).
    mu_s, lv_s = jax.block_until_ready(
        vencoder_forward(x, adj_bf, params, force_streamed=True))

    mu_b, lv_b = reference_kernel_dataflow(x, adj, raw)
    mu_f, lv_f = reference_f32(x, adj, raw)

    for m, l in ((mu, logvar), (mu_s, lv_s)):
        # Tight check vs a reference with the kernels' exact dtype dataflow.
        assert jnp.allclose(m, mu_b, atol=2e-2, rtol=2e-2)
        assert jnp.allclose(l, lv_b, atol=2e-2, rtol=2e-2)
        # Loose sanity check vs the full-f32 module semantics.
        assert jnp.allclose(m, mu_f, atol=1e-1, rtol=1e-1)
        assert jnp.allclose(l, lv_f, atol=1e-1, rtol=1e-1)

    print("KERNEL_OK")
</pallas_src>

<mosaic_0001>
module attributes {stable_mosaic.version = 11 : i64} {
  func.func @_fused_kernel(%arg0: i32, %arg1: memref<256x256xbf16, #tpu.memory_space<vmem>>, %arg2: memref<256x16xbf16, #tpu.memory_space<vmem>>, %arg3: memref<16x32xf32, #tpu.memory_space<vmem>>, %arg4: memref<1x32xf32, #tpu.memory_space<vmem>>, %arg5: memref<32x128xf32, #tpu.memory_space<vmem>>, %arg6: memref<1x128xf32, #tpu.memory_space<vmem>>, %arg7: memref<256x128xf32, #tpu.memory_space<vmem>>) attributes {dimension_semantics = [#tpu.dimension_semantics<arbitrary>], iteration_bounds = array<i64: 1>, scalar_prefetch = 0 : i64, scratch_operands = 0 : i64, tpu.core_type = #tpu.core_type<tc>, window_params = [{pipeline_mode = #tpu.pipeline_mode<synchronous>, transform_indices = @transform_0, window_bounds = array<i64: 256, 256>}, {pipeline_mode = #tpu.pipeline_mode<synchronous>, transform_indices = @transform_1, window_bounds = array<i64: 256, 16>}, {pipeline_mode = #tpu.pipeline_mode<synchronous>, transform_indices = @transform_2, window_bounds = array<i64: 16, 32>}, {pipeline_mode = #tpu.pipeline_mode<synchronous>, transform_indices = @transform_3, window_bounds = array<i64: 1, 32>}, {pipeline_mode = #tpu.pipeline_mode<synchronous>, transform_indices = @transform_4, window_bounds = array<i64: 32, 128>}, {pipeline_mode = #tpu.pipeline_mode<synchronous>, transform_indices = @transform_5, window_bounds = array<i64: 1, 128>}, {pipeline_mode = #tpu.pipeline_mode<synchronous>, transform_indices = @transform_6, window_bounds = array<i64: 256, 128>}]} {
    %c0 = arith.constant 0 : index
    %c0_0 = arith.constant 0 : index
    %0 = vector.load %arg1[%c0, %c0_0] : memref<256x256xbf16, #tpu.memory_space<vmem>>, vector<256x256xbf16>
    %c0_1 = arith.constant 0 : index
    %c0_2 = arith.constant 0 : index
    %1 = vector.load %arg2[%c0_1, %c0_2] : memref<256x16xbf16, #tpu.memory_space<vmem>>, vector<256x16xbf16>
    %cst = arith.constant dense<0.000000e+00> : vector<256x16xf32>
    %2 = tpu.matmul %0, %1, %cst {dimension_numbers = #tpu.dot_dimension_numbers<[1], [0], [0], [1], [0, 0, 1, 1], [], []>} : vector<256x256xbf16>, vector<256x16xbf16>, vector<256x16xf32> -> vector<256x16xf32>
    %c0_3 = arith.constant 0 : index
    %c0_4 = arith.constant 0 : index
    %3 = vector.load %arg3[%c0_3, %c0_4] : memref<16x32xf32, #tpu.memory_space<vmem>>, vector<16x32xf32>
    %cst_5 = arith.constant dense<0.000000e+00> : vector<256x32xf32>
    %4 = tpu.matmul %2, %3, %cst_5 {dimension_numbers = #tpu.dot_dimension_numbers<[1], [0], [0], [1], [0, 0, 1, 1], [], []>} : vector<256x16xf32>, vector<16x32xf32>, vector<256x32xf32> -> vector<256x32xf32>
    %c0_6 = arith.constant 0 : index
    %c0_7 = arith.constant 0 : index
    %5 = vector.load %arg4[%c0_6, %c0_7] : memref<1x32xf32, #tpu.memory_space<vmem>>, vector<1x32xf32>
    %6 = vector.broadcast %5 : vector<1x32xf32> to vector<256x32xf32>
    %7 = arith.addf %4, %6 : vector<256x32xf32>
    %cst_8 = arith.constant 0.000000e+00 : f32
    %8 = vector.broadcast %cst_8 : f32 to vector<256x32xf32>
    %9 = arith.maximumf %7, %8 : vector<256x32xf32>
    %c0_9 = arith.constant 0 : index
    %c0_10 = arith.constant 0 : index
    %10 = vector.load %arg5[%c0_9, %c0_10] : memref<32x128xf32, #tpu.memory_space<vmem>>, vector<32x128xf32>
    %cst_11 = arith.constant dense<0.000000e+00> : vector<256x128xf32>
    %11 = tpu.matmul %9, %10, %cst_11 {dimension_numbers = #tpu.dot_dimension_numbers<[1], [0], [0], [1], [0, 0, 1, 1], [], []>} : vector<256x32xf32>, vector<32x128xf32>, vector<256x128xf32> -> vector<256x128xf32>
    %12 = arith.truncf %11 : vector<256x128xf32> to vector<256x128xbf16>
    %cst_12 = arith.constant dense<0.000000e+00> : vector<256x128xf32>
    %13 = tpu.matmul %0, %12, %cst_12 {dimension_numbers = #tpu.dot_dimension_numbers<[1], [0], [0], [1], [0, 0, 1, 1], [], []>} : vector<256x256xbf16>, vector<256x128xbf16>, vector<256x128xf32> -> vector<256x128xf32>
    %c0_13 = arith.constant 0 : index
    %c0_14 = arith.constant 0 : index
    %14 = vector.load %arg6[%c0_13, %c0_14] : memref<1x128xf32, #tpu.memory_space<vmem>>, vector<1x128xf32>
    %15 = vector.broadcast %14 : vector<1x128xf32> to vector<256x128xf32>
    %16 = arith.addf %13, %15 : vector<256x128xf32>
    %c0_15 = arith.constant 0 : index
    %c0_16 = arith.constant 0 : index
    %17 = vector.load %arg7[%c0_15, %c0_16] : memref<256x128xf32, #tpu.memory_space<vmem>>, vector<256x128xf32>
    tpu.vector_store %arg7[%c0_15, %c0_16], %16 {strides = array<i32>} : memref<256x128xf32, #tpu.memory_space<vmem>>, vector<256x128xf32>,
    return
  }
  func.func @transform_0(%arg0: i32) -> (i32, i32) {
    %c0_i32 = arith.constant 0 : i32
    %c0_i32_0 = arith.constant 0 : i32
    %c0_i32_1 = arith.constant 0 : i32
    return %c0_i32, %c0_i32_0 : i32, i32
  }
  func.func @transform_1(%arg0: i32) -> (i32, i32) {
    %c0_i32 = arith.constant 0 : i32
    %c0_i32_0 = arith.constant 0 : i32
    %c0_i32_1 = arith.constant 0 : i32
    return %c0_i32, %c0_i32_0 : i32, i32
  }
  func.func @transform_2(%arg0: i32) -> (i32, i32) {
    %c0_i32 = arith.constant 0 : i32
    %c0_i32_0 = arith.constant 0 : i32
    %c0_i32_1 = arith.constant 0 : i32
    return %c0_i32, %c0_i32_0 : i32, i32
  }
  func.func @transform_3(%arg0: i32) -> (i32, i32) {
    %c0_i32 = arith.constant 0 : i32
    %c0_i32_0 = arith.constant 0 : i32
    %c0_i32_1 = arith.constant 0 : i32
    return %c0_i32, %c0_i32_0 : i32, i32
  }
  func.func @transform_4(%arg0: i32) -> (i32, i32) {
    %c0_i32 = arith.constant 0 : i32
    %c0_i32_0 = arith.constant 0 : i32
    %c0_i32_1 = arith.constant 0 : i32
    return %c0_i32, %c0_i32_0 : i32, i32
  }
  func.func @transform_5(%arg0: i32) -> (i32, i32) {
    %c0_i32 = arith.constant 0 : i32
    %c0_i32_0 = arith.constant 0 : i32
    %c0_i32_1 = arith.constant 0 : i32
    return %c0_i32, %c0_i32_0 : i32, i32
  }
  func.func @transform_6(%arg0: i32) -> (i32, i32) {
    %c0_i32 = arith.constant 0 : i32
    %c0_i32_0 = arith.constant 0 : i32
    %c0_i32_1 = arith.constant 0 : i32
    return %c0_i32, %c0_i32_0 : i32, i32
  }
}

</mosaic_0001>

<llo_original>
// kernel: tpu_custom_call.1
$region0: #{tpu_custom_call.1}
  #allocation0 [shape = 'u32[]', space=smem, size = 0x4, offset = 0x4, fixed_abs, tag = 'smem constant byte address 0x4 - core index']
  #allocation1 [shape = 'u32[144,128]{1,0:T(1,128)}', space=vmem, size = 0x12000, scoped, tag = 'internal scratch']
  %s0 = inlined_call_operand.hbm [shape: bf16[256,256], index: 0, kind: input, shape index: {}]
  %s1 = inlined_call_operand.vmem [shape: bf16[256,16], index: 1, kind: input, shape index: {}]
  %s2 = inlined_call_operand.vmem [shape: f32[16,32], index: 2, kind: input, shape index: {}]
  %s3 = inlined_call_operand.vmem [shape: f32[1,32], index: 3, kind: input, shape index: {}]
  %s4 = inlined_call_operand.vmem [shape: f32[32,128], index: 4, kind: input, shape index: {}]
  %s5 = inlined_call_operand.vmem [shape: f32[1,128], index: 5, kind: input, shape index: {}]
  %s6 = inlined_call_operand.hbm [shape: f32[256,128], index: 6, kind: output, shape index: {}]
  %s7 = sld [smem:[#allocation0]]
  $region38: #{tpu_custom_call.1} parent=0
    _
  %s9 = ssub.s32 1, %s7
  %s10 = scalar_select 0, %s9, %s7
  $region1: #{tpu_custom_call.1} parent=0
    #allocation2 [shape = 'u8[131072]{0}', space=vmem, size = 0x20000, scoped, tag = 'input window, operand 0, single buffered']
    #allocation3 [shape = 's32[1]{0}', space=sflag, size = 0x4, scoped, tag = 'scoped memory for tpu_custom_call.1']
    #allocation4 [shape = 's32[1]{0}', space=sflag, size = 0x4, scoped, tag = 'scoped memory for tpu_custom_call.1']
    #allocation5 [shape = 'u8[131072]{0}', space=vmem, size = 0x20000, scoped, tag = 'output window, operand 0, single buffered']
    %11 = vsyncpa [#allocation3], 0
    %12 = vsyncpa [#allocation4], 0
    // Predicated region
    $region2: #{tpu_custom_call.1} parent=1 // pred_check
      _
    $region3: #{tpu_custom_call.1} parent=1 // pred_check_branch
      %14 = sbr.rel (0) target = $region5
    $region4: #{tpu_custom_call.1} parent=1 // pred_region
      %s16 = ssub.s32 4096, 4096
      %17 = vsyncadd [#allocation3], %s16
      %s18 = sshll.u32 [#allocation2], 4
      %s19 = int_to_ptr.vmem [resolvable:$true] %s18
      %24 = dma.hbm_to_vmem [thread:$0]  %s0, 4096, %s19, [#allocation3], 128, 128, 8
    $region5: #{tpu_custom_call.1} parent=1 // pred_fallthru
      _
    // Predicated region
    $region6: #{tpu_custom_call.1} parent=1 // pred_check
      _
    $region7: #{tpu_custom_call.1} parent=1 // pred_check_branch
      %26 = sbr.rel (0) target = $region9
    $region8: #{tpu_custom_call.1} parent=1 // pred_region
      _
    $region9: #{tpu_custom_call.1} parent=1 // pred_fallthru
      _
    // Predicated region
    $region10: #{tpu_custom_call.1} parent=1 // pred_check
      _
    $region11: #{tpu_custom_call.1} parent=1 // pred_check_branch
      %28 = sbr.rel (0) target = $region13
    $region12: #{tpu_custom_call.1} parent=1 // pred_region
      _
    $region13: #{tpu_custom_call.1} parent=1 // pred_fallthru
      _
    // Predicated region
    $region14: #{tpu_custom_call.1} parent=1 // pred_check
      _
    $region15: #{tpu_custom_call.1} parent=1 // pred_check_branch
      %30 = sbr.rel (0) target = $region17
    $region16: #{tpu_custom_call.1} parent=1 // pred_region
      _
    $region17: #{tpu_custom_call.1} parent=1 // pred_fallthru
      _
    // Predicated region
    $region18: #{tpu_custom_call.1} parent=1 // pred_check
      _
    $region19: #{tpu_custom_call.1} parent=1 // pred_check_branch
      %32 = sbr.rel (0) target = $region21
    $region20: #{tpu_custom_call.1} parent=1 // pred_region
      _
    $region21: #{tpu_custom_call.1} parent=1 // pred_fallthru
      _
    // Predicated region
    $region22: #{tpu_custom_call.1} parent=1 // pred_check
      _
    $region23: #{tpu_custom_call.1} parent=1 // pred_check_branch
      %34 = sbr.rel (0) target = $region25
    $region24: #{tpu_custom_call.1} parent=1 // pred_region
      _
    $region25: #{tpu_custom_call.1} parent=1 // pred_fallthru
      _
    // Predicated region
    $region26: #{tpu_custom_call.1} parent=1 // pred_check
      _
    $region27: #{tpu_custom_call.1} parent=1 // pred_check_branch
      %36 = sbr.rel (0) target = $region29
    $region28: #{tpu_custom_call.1} parent=1 // pred_region
      %37 = dma.done [#allocation3], 4096
    $region29: #{tpu_custom_call.1} parent=1 // pred_fallthru
      _
    %v39 = vld [vmem:[#allocation2] sm:$0xff]
    %v40 = vld [vmem:[#allocation2 + $0x8] sm:$0xff]
    %v41 = vld [vmem:[#allocation2 + $0x10] sm:$0xff]
    %v42 = vld [vmem:[#allocation2 + $0x18] sm:$0xff]
    %v43 = vld [vmem:[#allocation2 + $0x20] sm:$0xff]
    %v44 = vld [vmem:[#allocation2 + $0x28] sm:$0xff]
    %v45 = vld [vmem:[#allocation2 + $0x30] sm:$0xff]
    %v46 = vld [vmem:[#allocation2 + $0x38] sm:$0xff]
    %v47 = vld [vmem:[#allocation2 + $0x40] sm:$0xff]
    %v48 = vld [vmem:[#allocation2 + $0x48] sm:$0xff]
    %v49 = vld [vmem:[#allocation2 + $0x50] sm:$0xff]
    %v50 = vld [vmem:[#allocation2 + $0x58] sm:$0xff]
    %v51 = vld [vmem:[#allocation2 + $0x60] sm:$0xff]
    %v52 = vld [vmem:[#allocation2 + $0x68] sm:$0xff]
    %v53 = vld [vmem:[#allocation2 + $0x70] sm:$0xff]
    %v54 = vld [vmem:[#allocation2 + $0x78] sm:$0xff]
    %v55 = vld [vmem:[#allocation2 + $0x80] sm:$0xff]
    %v56 = vld [vmem:[#allocation2 + $0x88] sm:$0xff]
    %v57 = vld [vmem:[#allocation2 + $0x90] sm:$0xff]
    %v58 = vld [vmem:[#allocation2 + $0x98] sm:$0xff]
    %v59 = vld [vmem:[#allocation2 + $0xa0] sm:$0xff]
    %v60 = vld [vmem:[#allocation2 + $0xa8] sm:$0xff]
    %v61 = vld [vmem:[#allocation2 + $0xb0] sm:$0xff]
    %v62 = vld [vmem:[#allocation2 + $0xb8] sm:$0xff]
    %v63 = vld [vmem:[#allocation2 + $0xc0] sm:$0xff]
    %v64 = vld [vmem:[#allocation2 + $0xc8] sm:$0xff]
    %v65 = vld [vmem:[#allocation2 + $0xd0] sm:$0xff]
    %v66 = vld [vmem:[#allocation2 + $0xd8] sm:$0xff]
    %v67 = vld [vmem:[#allocation2 + $0xe0] sm:$0xff]
    %v68 = vld [vmem:[#allocation2 + $0xe8] sm:$0xff]
    %v69 = vld [vmem:[#allocation2 + $0xf0] sm:$0xff]
    %v70 = vld [vmem:[#allocation2 + $0xf8] sm:$0xff]
    %v71 = vld [vmem:[%s1] sm:$0xf]
    %v72 = vld [vmem:[%s1 + $0x4] sm:$0xf]
    %v73 = vld [vmem:[%s1 + $0x8] sm:$0xf]
    %v74 = vld [vmem:[%s1 + $0xc] sm:$0xf]
    %v75 = vld [vmem:[%s1 + $0x10] sm:$0xf]
    %v76 = vld [vmem:[%s1 + $0x14] sm:$0xf]
    %v77 = vld [vmem:[%s1 + $0x18] sm:$0xf]
    %v78 = vld [vmem:[%s1 + $0x1c] sm:$0xf]
    %v79 = vld [vmem:[%s1 + $0x20] sm:$0xf]
    %v80 = vld [vmem:[%s1 + $0x24] sm:$0xf]
    %v81 = vld [vmem:[%s1 + $0x28] sm:$0xf]
    %v82 = vld [vmem:[%s1 + $0x2c] sm:$0xf]
    %v83 = vld [vmem:[%s1 + $0x30] sm:$0xf]
    %v84 = vld [vmem:[%s1 + $0x34] sm:$0xf]
    %v85 = vld [vmem:[%s1 + $0x38] sm:$0xf]
    %v86 = vld [vmem:[%s1 + $0x3c] sm:$0xf]
    %v87 = vld [vmem:[%s1 + $0x40] sm:$0xf]
    %v88 = vld [vmem:[%s1 + $0x44] sm:$0xf]
    %v89 = vld [vmem:[%s1 + $0x48] sm:$0xf]
    %v90 = vld [vmem:[%s1 + $0x4c] sm:$0xf]
    %v91 = vld [vmem:[%s1 + $0x50] sm:$0xf]
    %v92 = vld [vmem:[%s1 + $0x54] sm:$0xf]
    %v93 = vld [vmem:[%s1 + $0x58] sm:$0xf]
    %v94 = vld [vmem:[%s1 + $0x5c] sm:$0xf]
    %v95 = vld [vmem:[%s1 + $0x60] sm:$0xf]
    %v96 = vld [vmem:[%s1 + $0x64] sm:$0xf]
    %v97 = vld [vmem:[%s1 + $0x68] sm:$0xf]
    %v98 = vld [vmem:[%s1 + $0x6c] sm:$0xf]
    %v99 = vld [vmem:[%s1 + $0x70] sm:$0xf]
    %v100 = vld [vmem:[%s1 + $0x74] sm:$0xf]
    %v101 = vld [vmem:[%s1 + $0x78] sm:$0xf]
    %v102 = vld [vmem:[%s1 + $0x7c] sm:$0xf]
    %v135 = vunpack.c.l.b16 %v39
    %v136 = vunpack.c.h.b16 %v39
    %v137 = vunpack.c.l.b16 %v40
    %v138 = vunpack.c.h.b16 %v40
    %v139 = vunpack.c.l.b16 %v41
    %v140 = vunpack.c.h.b16 %v41
    %v141 = vunpack.c.l.b16 %v42
    %v142 = vunpack.c.h.b16 %v42
    %v143 = vunpack.c.l.b16 %v43
    %v144 = vunpack.c.h.b16 %v43
    %v145 = vunpack.c.l.b16 %v44
    %v146 = vunpack.c.h.b16 %v44
    %v147 = vunpack.c.l.b16 %v45
    %v148 = vunpack.c.h.b16 %v45
    %v149 = vunpack.c.l.b16 %v46
    %v150 = vunpack.c.h.b16 %v46
    %v151 = vunpack.c.l.b16 %v47
    %v152 = vunpack.c.h.b16 %v47
    %v153 = vunpack.c.l.b16 %v48
    %v154 = vunpack.c.h.b16 %v48
    %v155 = vunpack.c.l.b16 %v49
    %v156 = vunpack.c.h.b16 %v49
    %v157 = vunpack.c.l.b16 %v50
    %v158 = vunpack.c.h.b16 %v50
    %v159 = vunpack.c.l.b16 %v51
    %v160 = vunpack.c.h.b16 %v51
    %v161 = vunpack.c.l.b16 %v52
    %v162 = vunpack.c.h.b16 %v52
    %v163 = vunpack.c.l.b16 %v53
    %v164 = vunpack.c.h.b16 %v53
    %v165 = vunpack.c.l.b16 %v54
    %v166 = vunpack.c.h.b16 %v54
    %v167 = vunpack.c.l.b16 %v55
    %v168 = vunpack.c.h.b16 %v55
    %v169 = vunpack.c.l.b16 %v56
    %v170 = vunpack.c.h.b16 %v56
    %v171 = vunpack.c.l.b16 %v57
    %v172 = vunpack.c.h.b16 %v57
    %v173 = vunpack.c.l.b16 %v58
    %v174 = vunpack.c.h.b16 %v58
    %v175 = vunpack.c.l.b16 %v59
    %v176 = vunpack.c.h.b16 %v59
    %v177 = vunpack.c.l.b16 %v60
    %v178 = vunpack.c.h.b16 %v60
    %v179 = vunpack.c.l.b16 %v61
    %v180 = vunpack.c.h.b16 %v61
    %v181 = vunpack.c.l.b16 %v62
    %v182 = vunpack.c.h.b16 %v62
    %v183 = vunpack.c.l.b16 %v63
    %v184 = vunpack.c.h.b16 %v63
    %v185 = vunpack.c.l.b16 %v64
    %v186 = vunpack.c.h.b16 %v64
    %v187 = vunpack.c.l.b16 %v65
    %v188 = vunpack.c.h.b16 %v65
    %v189 = vunpack.c.l.b16 %v66
    %v190 = vunpack.c.h.b16 %v66
    %v191 = vunpack.c.l.b16 %v67
    %v192 = vunpack.c.h.b16 %v67
    %v193 = vunpack.c.l.b16 %v68
    %v194 = vunpack.c.h.b16 %v68
    %v195 = vunpack.c.l.b16 %v69
    %v196 = vunpack.c.h.b16 %v69
    %v197 = vunpack.c.l.b16 %v70
    %v198 = vunpack.c.h.b16 %v70
    %v199 = vpack.c.b16 %v137, %v135
    %v200 = vpack.c.b16 %v138, %v136
    %v201 = vpack.c.b16 %v141, %v139
    %v202 = vpack.c.b16 %v142, %v140
    %v203 = vpack.c.b16 %v145, %v143
    %v204 = vpack.c.b16 %v146, %v144
    %v205 = vpack.c.b16 %v149, %v147
    %v206 = vpack.c.b16 %v150, %v148
    %v207 = vpack.c.b16 %v153, %v151
    %v208 = vpack.c.b16 %v154, %v152
    %v209 = vpack.c.b16 %v157, %v155
    %v210 = vpack.c.b16 %v158, %v156
    %v211 = vpack.c.b16 %v161, %v159
    %v212 = vpack.c.b16 %v162, %v160
    %v213 = vpack.c.b16 %v165, %v163
    %v214 = vpack.c.b16 %v166, %v164
    %v215 = vpack.c.b16 %v169, %v167
    %v216 = vpack.c.b16 %v170, %v168
    %v217 = vpack.c.b16 %v173, %v171
    %v218 = vpack.c.b16 %v174, %v172
    %v219 = vpack.c.b16 %v177, %v175
    %v220 = vpack.c.b16 %v178, %v176
    %v221 = vpack.c.b16 %v181, %v179
    %v222 = vpack.c.b16 %v182, %v180
    %v223 = vpack.c.b16 %v185, %v183
    %v224 = vpack.c.b16 %v186, %v184
    %v225 = vpack.c.b16 %v189, %v187
    %v226 = vpack.c.b16 %v190, %v188
    %v227 = vpack.c.b16 %v193, %v191
    %v228 = vpack.c.b16 %v194, %v192
    %v229 = vpack.c.b16 %v197, %v195
    %v230 = vpack.c.b16 %v198, %v196
    %v295 = vunpack.c.l.b16 %v71
    %v296 = vunpack.c.l.b16 %v72
    %v297 = vunpack.c.l.b16 %v73
    %v298 = vunpack.c.l.b16 %v74
    %v299 = vunpack.c.l.b16 %v75
    %v300 = vunpack.c.l.b16 %v76
    %v301 = vunpack.c.l.b16 %v77
    %v302 = vunpack.c.l.b16 %v78
    %v303 = vunpack.c.l.b16 %v79
    %v304 = vunpack.c.l.b16 %v80
    %v305 = vunpack.c.l.b16 %v81
    %v306 = vunpack.c.l.b16 %v82
    %v307 = vunpack.c.l.b16 %v83
    %v308 = vunpack.c.l.b16 %v84
    %v309 = vunpack.c.l.b16 %v85
    %v310 = vunpack.c.l.b16 %v86
    %v311 = vunpack.c.l.b16 %v87
    %v312 = vunpack.c.l.b16 %v88
    %v313 = vunpack.c.l.b16 %v89
    %v314 = vunpack.c.l.b16 %v90
    %v315 = vunpack.c.l.b16 %v91
    %v316 = vunpack.c.l.b16 %v92
    %v317 = vunpack.c.l.b16 %v93
    %v318 = vunpack.c.l.b16 %v94
    %v319 = vunpack.c.l.b16 %v95
    %v320 = vunpack.c.l.b16 %v96
    %v321 = vunpack.c.l.b16 %v97
    %v322 = vunpack.c.l.b16 %v98
    %v323 = vunpack.c.l.b16 %v99
    %v324 = vunpack.c.l.b16 %v100
    %v325 = vunpack.c.l.b16 %v101
    %v326 = vunpack.c.l.b16 %v102
    %v327 = vpack.c.b16 %v296, %v295
    %v328 = vpack.c.b16 %v298, %v297
    %v329 = vpack.c.b16 %v300, %v299
    %v330 = vpack.c.b16 %v302, %v301
    %v331 = vpack.c.b16 %v304, %v303
    %v332 = vpack.c.b16 %v306, %v305
    %v333 = vpack.c.b16 %v308, %v307
    %v334 = vpack.c.b16 %v310, %v309
    %v335 = vpack.c.b16 %v312, %v311
    %v336 = vpack.c.b16 %v314, %v313
    %v337 = vpack.c.b16 %v316, %v315
    %v338 = vpack.c.b16 %v318, %v317
    %v339 = vpack.c.b16 %v320, %v319
    %v340 = vpack.c.b16 %v322, %v321
    %v341 = vpack.c.b16 %v324, %v323
    %v342 = vpack.c.b16 %v326, %v325
    %359 = vmatprep.subr.bf16.mxu0 0
    %360 = vmatpush1.bf16.msra.mxu0 %v327
    %361 = vmatprep.subr.bf16.mxu0 0
    %362 = vmatpush1.bf16.msra.mxu0 %v328
    %363 = vmatprep.subr.bf16.mxu0 0
    %364 = vmatpush1.bf16.msra.mxu0 %v329
    %365 = vmatprep.subr.bf16.mxu0 0
    %366 = vmatpush1.bf16.msra.mxu0 %v330
    %367 = vmatprep.subr.bf16.mxu0 0
    %368 = vmatpush1.bf16.msra.mxu0 %v331
    %369 = vmatprep.subr.bf16.mxu0 0
    %370 = vmatpush1.bf16.msra.mxu0 %v332
    %371 = vmatprep.subr.bf16.mxu0 0
    %372 = vmatpush1.bf16.msra.mxu0 %v333
    %373 = vmatprep.subr.bf16.mxu0 0
    %374 = vmatpush1.bf16.msra.mxu0 %v334
    %375 = vmatprep.subr.bf16.mxu0 0
    %376 = vmatpush1.bf16.msra.mxu0 %v335
    %377 = vmatprep.subr.bf16.mxu0 0
    %378 = vmatpush1.bf16.msra.mxu0 %v336
    %379 = vmatprep.subr.bf16.mxu0 0
    %380 = vmatpush1.bf16.msra.mxu0 %v337
    %381 = vmatprep.subr.bf16.mxu0 0
    %382 = vmatpush1.bf16.msra.mxu0 %v338
    %383 = vmatprep.subr.bf16.mxu0 0
    %384 = vmatpush1.bf16.msra.mxu0 %v339
    %385 = vmatprep.subr.bf16.mxu0 0
    %386 = vmatpush1.bf16.msra.mxu0 %v340
    %387 = vmatprep.subr.bf16.mxu0 0
    %388 = vmatpush1.bf16.msra.mxu0 %v341
    %389 = vmatprep.subr.bf16.mxu0 0
    %390 = vmatpush1.bf16.msra.mxu0 %v342
    %391 = vmatprep.mubr.bf16.mxu0 %v200
    %392 = vmatmul.mubr.bf16.gmra.mrb[0].mxu0 %v199
    %v393 = vpop.f32.mrb[0].mxu0
    %v394 = vadd.f32 0.0, %v393
    %v395 = vpop.f32.mrb[0].mxu0
    %v396 = vpop.f32.mrb[0].mxu0
    %v397 = vadd.f32 0.0, %v396
    %v398 = vpop.f32.mrb[0].mxu0
    %399 = vmatprep.mubr.bf16.mxu0 %v202
    %400 = vmatmul.mubr.bf16.gmra.mrb[0].mxu0 %v201
    %v401 = vpop.f32.mrb[0].mxu0
    %v402 = vadd.f32 0.0, %v401
    %v403 = vpop.f32.mrb[0].mxu0
    %v404 = vpop.f32.mrb[0].mxu0
    %v405 = vadd.f32 0.0, %v404
    %v406 = vpop.f32.mrb[0].mxu0
    %407 = vmatprep.mubr.bf16.mxu0 %v204
    %408 = vmatmul.mubr.bf16.gmra.mrb[0].mxu0 %v203
    %v409 = vpop.f32.mrb[0].mxu0
    %v410 = vadd.f32 0.0, %v409
    %v411 = vpop.f32.mrb[0].mxu0
    %v412 = vpop.f32.mrb[0].mxu0
    %v413 = vadd.f32 0.0, %v412
    %v414 = vpop.f32.mrb[0].mxu0
    %415 = vmatprep.mubr.bf16.mxu0 %v206
    %416 = vmatmul.mubr.bf16.gmra.mrb[0].mxu0 %v205
    %v417 = vpop.f32.mrb[0].mxu0
    %v418 = vadd.f32 0.0, %v417
    %v419 = vpop.f32.mrb[0].mxu0
    %v420 = vpop.f32.mrb[0].mxu0
    %v421 = vadd.f32 0.0, %v420
    %v422 = vpop.f32.mrb[0].mxu0
    %423 = vmatprep.mubr.bf16.mxu0 %v208
    %424 = vmatmul.mubr.bf16.gmra.mrb[0].mxu0 %v207
    %v425 = vpop.f32.mrb[0].mxu0
    %v426 = vadd.f32 0.0, %v425
    %v427 = vpop.f32.mrb[0].mxu0
    %v428 = vpop.f32.mrb[0].mxu0
    %v429 = vadd.f32 0.0, %v428
    %v430 = vpop.f32.mrb[0].mxu0
    %431 = vmatprep.mubr.bf16.mxu0 %v210
    %432 = vmatmul.mubr.bf16.gmra.mrb[0].mxu0 %v209
    %v433 = vpop.f32.mrb[0].mxu0
    %v434 = vadd.f32 0.0, %v433
    %v435 = vpop.f32.mrb[0].mxu0
    %v436 = vpop.f32.mrb[0].mxu0
    %v437 = vadd.f32 0.0, %v436
    %v438 = vpop.f32.mrb[0].mxu0
    %439 = vmatprep.mubr.bf16.mxu0 %v212
    %440 = vmatmul.mubr.bf16.gmra.mrb[0].mxu0 %v211
    %v441 = vpop.f32.mrb[0].mxu0
    %v442 = vadd.f32 0.0, %v441
    %v443 = vpop.f32.mrb[0].mxu0
    %v444 = vpop.f32.mrb[0].mxu0
    %v445 = vadd.f32 0.0, %v444
    %v446 = vpop.f32.mrb[0].mxu0
    %447 = vmatprep.mubr.bf16.mxu0 %v214
    %448 = vmatmul.mubr.bf16.gmra.mrb[0].mxu0 %v213
    %v449 = vpop.f32.mrb[0].mxu0
    %v450 = vadd.f32 0.0, %v449
    %v451 = vpop.f32.mrb[0].mxu0
    %v452 = vpop.f32.mrb[0].mxu0
    %v453 = vadd.f32 0.0, %v452
    %v454 = vpop.f32.mrb[0].mxu0
    %455 = vmatprep.mubr.bf16.mxu0 %v216
    %456 = vmatmul.mubr.bf16.gmra.mrb[0].mxu0 %v215
    %v457 = vpop.f32.mrb[0].mxu0
    %v458 = vadd.f32 0.0, %v457
    %v459 = vpop.f32.mrb[0].mxu0
    %v460 = vpop.f32.mrb[0].mxu0
    %v461 = vadd.f32 0.0, %v460
    %v462 = vpop.f32.mrb[0].mxu0
    %463 = vmatprep.mubr.bf16.mxu0 %v218
    %464 = vmatmul.mubr.bf16.gmra.mrb[0].mxu0 %v217
    %v465 = vpop.f32.mrb[0].mxu0
    %v466 = vadd.f32 0.0, %v465
    %v467 = vpop.f32.mrb[0].mxu0
    %v468 = vpop.f32.mrb[0].mxu0
    %v469 = vadd.f32 0.0, %v468
    %v470 = vpop.f32.mrb[0].mxu0
    %471 = vmatprep.mubr.bf16.mxu0 %v220
    %472 = vmatmul.mubr.bf16.gmra.mrb[0].mxu0 %v219
    %v473 = vpop.f32.mrb[0].mxu0
    %v474 = vadd.f32 0.0, %v473
    %v475 = vpop.f32.mrb[0].mxu0
    %v476 = vpop.f32.mrb[0].mxu0
    %v477 = vadd.f32 0.0, %v476
    %v478 = vpop.f32.mrb[0].mxu0
    %479 = vmatprep.mubr.bf16.mxu0 %v222
    %480 = vmatmul.mubr.bf16.gmra.mrb[0].mxu0 %v221
    %v481 = vpop.f32.mrb[0].mxu0
    %v482 = vadd.f32 0.0, %v481
    %v483 = vpop.f32.mrb[0].mxu0
    %v484 = vpop.f32.mrb[0].mxu0
    %v485 = vadd.f32 0.0, %v484
    %v486 = vpop.f32.mrb[0].mxu0
    %487 = vmatprep.mubr.bf16.mxu0 %v224
    %488 = vmatmul.mubr.bf16.gmra.mrb[0].mxu0 %v223
    %v489 = vpop.f32.mrb[0].mxu0
    %v490 = vadd.f32 0.0, %v489
    %v491 = vpop.f32.mrb[0].mxu0
    %v492 = vpop.f32.mrb[0].mxu0
    %v493 = vadd.f32 0.0, %v492
    %v494 = vpop.f32.mrb[0].mxu0
    %495 = vmatprep.mubr.bf16.mxu0 %v226
    %496 = vmatmul.mubr.bf16.gmra.mrb[0].mxu0 %v225
    %v497 = vpop.f32.mrb[0].mxu0
    %v498 = vadd.f32 0.0, %v497
    %v499 = vpop.f32.mrb[0].mxu0
    %v500 = vpop.f32.mrb[0].mxu0
    %v501 = vadd.f32 0.0, %v500
    %v502 = vpop.f32.mrb[0].mxu0
    %503 = vmatprep.mubr.bf16.mxu0 %v228
    %504 = vmatmul.mubr.bf16.gmra.mrb[0].mxu0 %v227
    %v505 = vpop.f32.mrb[0].mxu0
    %v506 = vadd.f32 0.0, %v505
    %v507 = vpop.f32.mrb[0].mxu0
    %v508 = vpop.f32.mrb[0].mxu0
    %v509 = vadd.f32 0.0, %v508
    %v510 = vpop.f32.mrb[0].mxu0
    %511 = vmatprep.mubr.bf16.mxu0 %v230
    %512 = vmatmul.mubr.bf16.gmra.mrb[0].mxu0 %v229
    %v513 = vpop.f32.mrb[0].mxu0
    %v514 = vadd.f32 0.0, %v513
    %v515 = vpop.f32.mrb[0].mxu0
    %v516 = vpop.f32.mrb[0].mxu0
    %v517 = vadd.f32 0.0, %v516
    %v518 = vpop.f32.mrb[0].mxu0
    %519 = vdwg.mxu0
    %v520 = vld [vmem:[%s2] sm:$0xff]
    %v521 = vld [vmem:[%s2 + $0x8] sm:$0xff]
    %v522 = vld [vmem:[%s3] sm:$0x1]
    %v524 = vlaneseq
    %v525 = vshrl.u32 %v524, 7
    %v526 = vsub.s32 0, %v525
    %v527 = vrot.slane %v522, %v526
    %vm529 = vcmask 130048
    %v531 = vsel %vm529, %v394, 0
    %v534 = vsel %vm529, %v397, 0
    %v537 = vsel %vm529, %v402, 0
    %v540 = vsel %vm529, %v405, 0
    %v543 = vsel %vm529, %v410, 0
    %v546 = vsel %vm529, %v413, 0
    %v549 = vsel %vm529, %v418, 0
    %v552 = vsel %vm529, %v421, 0
    %v555 = vsel %vm529, %v426, 0
    %v558 = vsel %vm529, %v429, 0
    %v561 = vsel %vm529, %v434, 0
    %v564 = vsel %vm529, %v437, 0
    %v567 = vsel %vm529, %v442, 0
    %v570 = vsel %vm529, %v445, 0
    %v573 = vsel %vm529, %v450, 0
    %v576 = vsel %vm529, %v453, 0
    %v579 = vsel %vm529, %v458, 0
    %v582 = vsel %vm529, %v461, 0
    %v585 = vsel %vm529, %v466, 0
    %v588 = vsel %vm529, %v469, 0
    %v591 = vsel %vm529, %v474, 0
    %v594 = vsel %vm529, %v477, 0
    %v597 = vsel %vm529, %v482, 0
    %v600 = vsel %vm529, %v485, 0
    %v603 = vsel %vm529, %v490, 0
    %v606 = vsel %vm529, %v493, 0
    %v609 = vsel %vm529, %v498, 0
    %v612 = vsel %vm529, %v501, 0
    %v615 = vsel %vm529, %v506, 0
    %v618 = vsel %vm529, %v509, 0
    %v621 = vsel %vm529, %v514, 0
    %v624 = vsel %vm529, %v517, 0
    %626 = vmatprep.subr.mxu0 0.0
    %627 = vmatpush1.msra.mxu0 %v520
    %628 = vmatprep.subr.mxu0 0.0
    %629 = vmatpush1.msra.mxu0 %v521
    %630 = vmatprep.subr.mxu0 0.0
    %631 = vmatpush1.msra.mxu0 0.0
    %632 = vmatprep.subr.mxu0 0.0
    %633 = vmatpush1.msra.mxu0 0.0
    %634 = vmatprep.subr.mxu0 0.0
    %635 = vmatpush1.msra.mxu0 0.0
    %636 = vmatprep.subr.mxu0 0.0
    %637 = vmatpush1.msra.mxu0 0.0
    %638 = vmatprep.subr.mxu0 0.0
    %639 = vmatpush1.msra.mxu0 0.0
    %640 = vmatprep.subr.mxu0 0.0
    %641 = vmatpush1.msra.mxu0 0.0
    %642 = vmatprep.subr.mxu0 0.0
    %643 = vmatpush1.msra.mxu0 0.0
    %644 = vmatprep.subr.mxu0 0.0
    %645 = vmatpush1.msra.mxu0 0.0
    %646 = vmatprep.subr.mxu0 0.0
    %647 = vmatpush1.msra.mxu0 0.0
    %648 = vmatprep.subr.mxu0 0.0
    %649 = vmatpush1.msra.mxu0 0.0
    %650 = vmatprep.subr.mxu0 0.0
    %651 = vmatpush1.msra.mxu0 0.0
    %652 = vmatprep.subr.mxu0 0.0
    %653 = vmatpush1.msra.mxu0 0.0
    %654 = vmatprep.subr.mxu0 0.0
    %655 = vmatpush1.msra.mxu0 0.0
    %656 = vmatprep.subr.mxu0 0.0
    %657 = vmatpush1.msra.mxu0 0.0
    %658 = vmatprep.subr.mxu0 0.0
    %659 = vmatpush1.msra.mxu0 0.0
    %660 = vmatprep.subr.mxu0 0.0
    %661 = vmatpush1.msra.mxu0 0.0
    %662 = vmatprep.subr.mxu0 0.0
    %663 = vmatpush1.msra.mxu0 0.0
    %664 = vmatprep.subr.mxu0 0.0
    %665 = vmatpush1.msra.mxu0 0.0
    %666 = vmatprep.subr.mxu0 0.0
    %667 = vmatpush1.msra.mxu0 0.0
    %668 = vmatprep.subr.mxu0 0.0
    %669 = vmatpush1.msra.mxu0 0.0
    %670 = vmatprep.subr.mxu0 0.0
    %671 = vmatpush1.msra.mxu0 0.0
    %672 = vmatprep.subr.mxu0 0.0
    %673 = vmatpush1.msra.mxu0 0.0
    %674 = vmatprep.subr.mxu0 0.0
    %675 = vmatpush1.msra.mxu0 0.0
    %676 = vmatprep.subr.mxu0 0.0
    %677 = vmatpush1.msra.mxu0 0.0
    %678 = vmatprep.subr.mxu0 0.0
    %679 = vmatpush1.msra.mxu0 0.0
    %680 = vmatprep.subr.mxu0 0.0
    %681 = vmatpush1.msra.mxu0 0.0
    %682 = vmatprep.subr.mxu0 0.0
    %683 = vmatpush1.msra.mxu0 0.0
    %684 = vmatprep.subr.mxu0 0.0
    %685 = vmatpush1.msra.mxu0 0.0
    %686 = vmatprep.subr.mxu0 0.0
    %687 = vmatpush1.msra.mxu0 0.0
    %688 = vmatprep.subr.mxu0 0.0
    %689 = vmatpush1.msra.mxu0 0.0
    %690 = vmatprep.mubr.f32.mxu0 0.0
    %691 = vmatmul.mubr.f32.gmra.mrb[0].mxu0 %v531
    %v692 = vpop.f32.mrb[0].mxu0
    %v693 = vadd.f32 %v527, %v692
    %v694 = vpop.f32.mrb[0].mxu0
    %695 = vmatprep.mubr.f32.mxu0 0.0
    %696 = vmatmul.mubr.f32.gmra.mrb[0].mxu0 %v534
    %v697 = vpop.f32.mrb[0].mxu0
    %v698 = vadd.f32 %v527, %v697
    %v699 = vpop.f32.mrb[0].mxu0
    %700 = vmatprep.mubr.f32.mxu0 0.0
    %701 = vmatmul.mubr.f32.gmra.mrb[0].mxu0 %v537
    %v702 = vpop.f32.mrb[0].mxu0
    %v703 = vadd.f32 %v527, %v702
    %v704 = vpop.f32.mrb[0].mxu0
    %705 = vmatprep.mubr.f32.mxu0 0.0
    %706 = vmatmul.mubr.f32.gmra.mrb[0].mxu0 %v540
    %v707 = vpop.f32.mrb[0].mxu0
    %v708 = vadd.f32 %v527, %v707
    %v709 = vpop.f32.mrb[0].mxu0
    %710 = vmatprep.mubr.f32.mxu0 0.0
    %711 = vmatmul.mubr.f32.gmra.mrb[0].mxu0 %v543
    %v712 = vpop.f32.mrb[0].mxu0
    %v713 = vadd.f32 %v527, %v712
    %v714 = vpop.f32.mrb[0].mxu0
    %715 = vmatprep.mubr.f32.mxu0 0.0
    %716 = vmatmul.mubr.f32.gmra.mrb[0].mxu0 %v546
    %v717 = vpop.f32.mrb[0].mxu0
    %v718 = vadd.f32 %v527, %v717
    %v719 = vpop.f32.mrb[0].mxu0
    %720 = vmatprep.mubr.f32.mxu0 0.0
    %721 = vmatmul.mubr.f32.gmra.mrb[0].mxu0 %v549
    %v722 = vpop.f32.mrb[0].mxu0
    %v723 = vadd.f32 %v527, %v722
    %v724 = vpop.f32.mrb[0].mxu0
    %725 = vmatprep.mubr.f32.mxu0 0.0
    %726 = vmatmul.mubr.f32.gmra.mrb[0].mxu0 %v552
    %v727 = vpop.f32.mrb[0].mxu0
    %v728 = vadd.f32 %v527, %v727
    %v729 = vpop.f32.mrb[0].mxu0
    %730 = vmatprep.mubr.f32.mxu0 0.0
    %731 = vmatmul.mubr.f32.gmra.mrb[0].mxu0 %v555
    %v732 = vpop.f32.mrb[0].mxu0
    %v733 = vadd.f32 %v527, %v732
    %v734 = vpop.f32.mrb[0].mxu0
    %735 = vmatprep.mubr.f32.mxu0 0.0
    %736 = vmatmul.mubr.f32.gmra.mrb[0].mxu0 %v558
    %v737 = vpop.f32.mrb[0].mxu0
    %v738 = vadd.f32 %v527, %v737
    %v739 = vpop.f32.mrb[0].mxu0
    %740 = vmatprep.mubr.f32.mxu0 0.0
    %741 = vmatmul.mubr.f32.gmra.mrb[0].mxu0 %v561
    %v742 = vpop.f32.mrb[0].mxu0
    %v743 = vadd.f32 %v527, %v742
    %v744 = vpop.f32.mrb[0].mxu0
    %745 = vmatprep.mubr.f32.mxu0 0.0
    %746 = vmatmul.mubr.f32.gmra.mrb[0].mxu0 %v564
    %v747 = vpop.f32.mrb[0].mxu0
    %v748 = vadd.f32 %v527, %v747
    %v749 = vpop.f32.mrb[0].mxu0
    %750 = vmatprep.mubr.f32.mxu0 0.0
    %751 = vmatmul.mubr.f32.gmra.mrb[0].mxu0 %v567
    %v752 = vpop.f32.mrb[0].mxu0
    %v753 = vadd.f32 %v527, %v752
    %v754 = vpop.f32.mrb[0].mxu0
    %755 = vmatprep.mubr.f32.mxu0 0.0
    %756 = vmatmul.mubr.f32.gmra.mrb[0].mxu0 %v570
    %v757 = vpop.f32.mrb[0].mxu0
    %v758 = vadd.f32 %v527, %v757
    %v759 = vpop.f32.mrb[0].mxu0
    %760 = vmatprep.mubr.f32.mxu0 0.0
    %761 = vmatmul.mubr.f32.gmra.mrb[0].mxu0 %v573
    %v762 = vpop.f32.mrb[0].mxu0
    %v763 = vadd.f32 %v527, %v762
    %v764 = vpop.f32.mrb[0].mxu0
    %765 = vmatprep.mubr.f32.mxu0 0.0
    %766 = vmatmul.mubr.f32.gmra.mrb[0].mxu0 %v576
    %v767 = vpop.f32.mrb[0].mxu0
    %v768 = vadd.f32 %v527, %v767
    %v769 = vpop.f32.mrb[0].mxu0
    %770 = vmatprep.mubr.f32.mxu0 0.0
    %771 = vmatmul.mubr.f32.gmra.mrb[0].mxu0 %v579
    %v772 = vpop.f32.mrb[0].mxu0
    %v773 = vadd.f32 %v527, %v772
    %v774 = vpop.f32.mrb[0].mxu0
    %775 = vmatprep.mubr.f32.mxu0 0.0
    %776 = vmatmul.mubr.f32.gmra.mrb[0].mxu0 %v582
    %v777 = vpop.f32.mrb[0].mxu0
    %v778 = vadd.f32 %v527, %v777
    %v779 = vpop.f32.mrb[0].mxu0
    %780 = vmatprep.mubr.f32.mxu0 0.0
    %781 = vmatmul.mubr.f32.gmra.mrb[0].mxu0 %v585
    %v782 = vpop.f32.mrb[0].mxu0
    %v783 = vadd.f32 %v527, %v782
    %v784 = vpop.f32.mrb[0].mxu0
    %785 = vmatprep.mubr.f32.mxu0 0.0
    %786 = vmatmul.mubr.f32.gmra.mrb[0].mxu0 %v588
    %v787 = vpop.f32.mrb[0].mxu0
    %v788 = vadd.f32 %v527, %v787
    %v789 = vpop.f32.mrb[0].mxu0
    %790 = vmatprep.mubr.f32.mxu0 0.0
    %791 = vmatmul.mubr.f32.gmra.mrb[0].mxu0 %v591
    %v792 = vpop.f32.mrb[0].mxu0
    %v793 = vadd.f32 %v527, %v792
    %v794 = vpop.f32.mrb[0].mxu0
    %795 = vmatprep.mubr.f32.mxu0 0.0
    %796 = vmatmul.mubr.f32.gmra.mrb[0].mxu0 %v594
    %v797 = vpop.f32.mrb[0].mxu0
    %v798 = vadd.f32 %v527, %v797
    %v799 = vpop.f32.mrb[0].mxu0
    %800 = vmatprep.mubr.f32.mxu0 0.0
    %801 = vmatmul.mubr.f32.gmra.mrb[0].mxu0 %v597
    %v802 = vpop.f32.mrb[0].mxu0
    %v803 = vadd.f32 %v527, %v802
    %v804 = vpop.f32.mrb[0].mxu0
    %805 = vmatprep.mubr.f32.mxu0 0.0
    %806 = vmatmul.mubr.f32.gmra.mrb[0].mxu0 %v600
    %v807 = vpop.f32.mrb[0].mxu0
    %v808 = vadd.f32 %v527, %v807
    %v809 = vpop.f32.mrb[0].mxu0
    %810 = vmatprep.mubr.f32.mxu0 0.0
    %811 = vmatmul.mubr.f32.gmra.mrb[0].mxu0 %v603
    %v812 = vpop.f32.mrb[0].mxu0
    %v813 = vadd.f32 %v527, %v812
    %v814 = vpop.f32.mrb[0].mxu0
    %815 = vmatprep.mubr.f32.mxu0 0.0
    %816 = vmatmul.mubr.f32.gmra.mrb[0].mxu0 %v606
    %v817 = vpop.f32.mrb[0].mxu0
    %v818 = vadd.f32 %v527, %v817
    %v819 = vpop.f32.mrb[0].mxu0
    %820 = vmatprep.mubr.f32.mxu0 0.0
    %821 = vmatmul.mubr.f32.gmra.mrb[0].mxu0 %v609
    %v822 = vpop.f32.mrb[0].mxu0
    %v823 = vadd.f32 %v527, %v822
    %v824 = vpop.f32.mrb[0].mxu0
    %825 = vmatprep.mubr.f32.mxu0 0.0
    %826 = vmatmul.mubr.f32.gmra.mrb[0].mxu0 %v612
    %v827 = vpop.f32.mrb[0].mxu0
    %v828 = vadd.f32 %v527, %v827
    %v829 = vpop.f32.mrb[0].mxu0
    %830 = vmatprep.mubr.f32.mxu0 0.0
    %831 = vmatmul.mubr.f32.gmra.mrb[0].mxu0 %v615
    %v832 = vpop.f32.mrb[0].mxu0
    %v833 = vadd.f32 %v527, %v832
    %v834 = vpop.f32.mrb[0].mxu0
    %835 = vmatprep.mubr.f32.mxu0 0.0
    %836 = vmatmul.mubr.f32.gmra.mrb[0].mxu0 %v618
    %v837 = vpop.f32.mrb[0].mxu0
    %v838 = vadd.f32 %v527, %v837
    %v839 = vpop.f32.mrb[0].mxu0
    %840 = vmatprep.mubr.f32.mxu0 0.0
    %841 = vmatmul.mubr.f32.gmra.mrb[0].mxu0 %v621
    %v842 = vpop.f32.mrb[0].mxu0
    %v843 = vadd.f32 %v527, %v842
    %v844 = vpop.f32.mrb[0].mxu0
    %845 = vmatprep.mubr.f32.mxu0 0.0
    %846 = vmatmul.mubr.f32.gmra.mrb[0].mxu0 %v624
    %v847 = vpop.f32.mrb[0].mxu0
    %v848 = vadd.f32 %v527, %v847
    %v849 = vpop.f32.mrb[0].mxu0
    %850 = vdwg.mxu0
    %v851 = vmax.f32 %v693, 0.0
    %v852 = vmax.f32 %v698, 0.0
    %v853 = vmax.f32 %v703, 0.0
    %v854 = vmax.f32 %v708, 0.0
    %v855 = vmax.f32 %v713, 0.0
    %v856 = vmax.f32 %v718, 0.0
    %v857 = vmax.f32 %v723, 0.0
    %v858 = vmax.f32 %v728, 0.0
    %v859 = vmax.f32 %v733, 0.0
    %v860 = vmax.f32 %v738, 0.0
    %v861 = vmax.f32 %v743, 0.0
    %v862 = vmax.f32 %v748, 0.0
    %v863 = vmax.f32 %v753, 0.0
    %v864 = vmax.f32 %v758, 0.0
    %v865 = vmax.f32 %v763, 0.0
    %v866 = vmax.f32 %v768, 0.0
    %v867 = vmax.f32 %v773, 0.0
    %v868 = vmax.f32 %v778, 0.0
    %v869 = vmax.f32 %v783, 0.0
    %v870 = vmax.f32 %v788, 0.0
    %v871 = vmax.f32 %v793, 0.0
    %v872 = vmax.f32 %v798, 0.0
    %v873 = vmax.f32 %v803, 0.0
    %v874 = vmax.f32 %v808, 0.0
    %v875 = vmax.f32 %v813, 0.0
    %v876 = vmax.f32 %v818, 0.0
    %v877 = vmax.f32 %v823, 0.0
    %v878 = vmax.f32 %v828, 0.0
    %v879 = vmax.f32 %v833, 0.0
    %v880 = vmax.f32 %v838, 0.0
    %v881 = vmax.f32 %v843, 0.0
    %v882 = vmax.f32 %v848, 0.0
    %v883 = vld [vmem:[%s4] sm:$0xff]
    %v884 = vld [vmem:[%s4 + $0x8] sm:$0xff]
    %v885 = vld [vmem:[%s4 + $0x10] sm:$0xff]
    %v886 = vld [vmem:[%s4 + $0x18] sm:$0xff]
    %vm887 = vcmask 261120
    %v889 = vsel %vm887, %v851, 0
    %v892 = vsel %vm887, %v852, 0
    %v895 = vsel %vm887, %v853, 0
    %v898 = vsel %vm887, %v854, 0
    %v901 = vsel %vm887, %v855, 0
    %v904 = vsel %vm887, %v856, 0
    %v907 = vsel %vm887, %v857, 0
    %v910 = vsel %vm887, %v858, 0
    %v913 = vsel %vm887, %v859, 0
    %v916 = vsel %vm887, %v860, 0
    %v919 = vsel %vm887, %v861, 0
    %v922 = vsel %vm887, %v862, 0
    %v925 = vsel %vm887, %v863, 0
    %v928 = vsel %vm887, %v864, 0
    %v931 = vsel %vm887, %v865, 0
    %v934 = vsel %vm887, %v866, 0
    %v937 = vsel %vm887, %v867, 0
    %v940 = vsel %vm887, %v868, 0
    %v943 = vsel %vm887, %v869, 0
    %v946 = vsel %vm887, %v870, 0
    %v949 = vsel %vm887, %v871, 0
    %v952 = vsel %vm887, %v872, 0
    %v955 = vsel %vm887, %v873, 0
    %v958 = vsel %vm887, %v874, 0
    %v961 = vsel %vm887, %v875, 0
    %v964 = vsel %vm887, %v876, 0
    %v967 = vsel %vm887, %v877, 0
    %v970 = vsel %vm887, %v878, 0
    %v973 = vsel %vm887, %v879, 0
    %v976 = vsel %vm887, %v880, 0
    %v979 = vsel %vm887, %v881, 0
    %v982 = vsel %vm887, %v882, 0
    %984 = vmatprep.subr.mxu0 0.0
    %985 = vmatpush1.msra.mxu0 %v883
    %986 = vmatprep.subr.mxu0 0.0
    %987 = vmatpush1.msra.mxu0 %v884
    %988 = vmatprep.subr.mxu0 0.0
    %989 = vmatpush1.msra.mxu0 %v885
    %990 = vmatprep.subr.mxu0 0.0
    %991 = vmatpush1.msra.mxu0 %v886
    %992 = vmatprep.subr.mxu0 0.0
    %993 = vmatpush1.msra.mxu0 0.0
    %994 = vmatprep.subr.mxu0 0.0
    %995 = vmatpush1.msra.mxu0 0.0
    %996 = vmatprep.subr.mxu0 0.0
    %997 = vmatpush1.msra.mxu0 0.0
    %998 = vmatprep.subr.mxu0 0.0
    %999 = vmatpush1.msra.mxu0 0.0
    %1000 = vmatprep.subr.mxu0 0.0
    %1001 = vmatpush1.msra.mxu0 0.0
    %1002 = vmatprep.subr.mxu0 0.0
    %1003 = vmatpush1.msra.mxu0 0.0
    %1004 = vmatprep.subr.mxu0 0.0
    %1005 = vmatpush1.msra.mxu0 0.0
    %1006 = vmatprep.subr.mxu0 0.0
    %1007 = vmatpush1.msra.mxu0 0.0
    %1008 = vmatprep.subr.mxu0 0.0
    %1009 = vmatpush1.msra.mxu0 0.0
    %1010 = vmatprep.subr.mxu0 0.0
    %1011 = vmatpush1.msra.mxu0 0.0
    %1012 = vmatprep.subr.mxu0 0.0
    %1013 = vmatpush1.msra.mxu0 0.0
    %1014 = vmatprep.subr.mxu0 0.0
    %1015 = vmatpush1.msra.mxu0 0.0
    %1016 = vmatprep.subr.mxu0 0.0
    %1017 = vmatpush1.msra.mxu0 0.0
    %1018 = vmatprep.subr.mxu0 0.0
    %1019 = vmatpush1.msra.mxu0 0.0
    %1020 = vmatprep.subr.mxu0 0.0
    %1021 = vmatpush1.msra.mxu0 0.0
    %1022 = vmatprep.subr.mxu0 0.0
    %1023 = vmatpush1.msra.mxu0 0.0
    %1024 = vmatprep.subr.mxu0 0.0
    %1025 = vmatpush1.msra.mxu0 0.0
    %1026 = vmatprep.subr.mxu0 0.0
    %1027 = vmatpush1.msra.mxu0 0.0
    %1028 = vmatprep.subr.mxu0 0.0
    %1029 = vmatpush1.msra.mxu0 0.0
    %1030 = vmatprep.subr.mxu0 0.0
    %1031 = vmatpush1.msra.mxu0 0.0
    %1032 = vmatprep.subr.mxu0 0.0
    %1033 = vmatpush1.msra.mxu0 0.0
    %1034 = vmatprep.subr.mxu0 0.0
    %1035 = vmatpush1.msra.mxu0 0.0
    %1036 = vmatprep.subr.mxu0 0.0
    %1037 = vmatpush1.msra.mxu0 0.0
    %1038 = vmatprep.subr.mxu0 0.0
    %1039 = vmatpush1.msra.mxu0 0.0
    %1040 = vmatprep.subr.mxu0 0.0
    %1041 = vmatpush1.msra.mxu0 0.0
    %1042 = vmatprep.subr.mxu0 0.0
    %1043 = vmatpush1.msra.mxu0 0.0
    %1044 = vmatprep.subr.mxu0 0.0
    %1045 = vmatpush1.msra.mxu0 0.0
    %1046 = vmatprep.subr.mxu0 0.0
    %1047 = vmatpush1.msra.mxu0 0.0
    %1048 = vmatprep.mubr.f32.mxu0 0.0
    %1049 = vmatmul.mubr.f32.gmra.mrb[0].mxu0 %v889
    %v1050 = vpop.f32.mrb[0].mxu0
    %v1051 = vadd.f32 0.0, %v1050
    %v1052 = vpop.f32.mrb[0].mxu0
    %1053 = vmatprep.mubr.f32.mxu0 0.0
    %1054 = vmatmul.mubr.f32.gmra.mrb[0].mxu0 %v892
    %v1055 = vpop.f32.mrb[0].mxu0
    %v1056 = vadd.f32 0.0, %v1055
    %v1057 = vpop.f32.mrb[0].mxu0
    %1058 = vmatprep.mubr.f32.mxu0 0.0
    %1059 = vmatmul.mubr.f32.gmra.mrb[0].mxu0 %v895
    %v1060 = vpop.f32.mrb[0].mxu0
    %v1061 = vadd.f32 0.0, %v1060
    %v1062 = vpop.f32.mrb[0].mxu0
    %1063 = vmatprep.mubr.f32.mxu0 0.0
    %1064 = vmatmul.mubr.f32.gmra.mrb[0].mxu0 %v898
    %v1065 = vpop.f32.mrb[0].mxu0
    %v1066 = vadd.f32 0.0, %v1065
    %v1067 = vpop.f32.mrb[0].mxu0
    %1068 = vmatprep.mubr.f32.mxu0 0.0
    %1069 = vmatmul.mubr.f32.gmra.mrb[0].mxu0 %v901
    %v1070 = vpop.f32.mrb[0].mxu0
    %v1071 = vadd.f32 0.0, %v1070
    %v1072 = vpop.f32.mrb[0].mxu0
    %1073 = vmatprep.mubr.f32.mxu0 0.0
    %1074 = vmatmul.mubr.f32.gmra.mrb[0].mxu0 %v904
    %v1075 = vpop.f32.mrb[0].mxu0
    %v1076 = vadd.f32 0.0, %v1075
    %v1077 = vpop.f32.mrb[0].mxu0
    %1078 = vmatprep.mubr.f32.mxu0 0.0
    %1079 = vmatmul.mubr.f32.gmra.mrb[0].mxu0 %v907
    %v1080 = vpop.f32.mrb[0].mxu0
    %v1081 = vadd.f32 0.0, %v1080
    %v1082 = vpop.f32.mrb[0].mxu0
    %1083 = vmatprep.mubr.f32.mxu0 0.0
    %1084 = vmatmul.mubr.f32.gmra.mrb[0].mxu0 %v910
    %v1085 = vpop.f32.mrb[0].mxu0
    %v1086 = vadd.f32 0.0, %v1085
    %v1087 = vpop.f32.mrb[0].mxu0
    %1088 = vmatprep.mubr.f32.mxu0 0.0
    %1089 = vmatmul.mubr.f32.gmra.mrb[0].mxu0 %v913
    %v1090 = vpop.f32.mrb[0].mxu0
    %v1091 = vadd.f32 0.0, %v1090
    %v1092 = vpop.f32.mrb[0].mxu0
    %1093 = vmatprep.mubr.f32.mxu0 0.0
    %1094 = vmatmul.mubr.f32.gmra.mrb[0].mxu0 %v916
    %v1095 = vpop.f32.mrb[0].mxu0
    %v1096 = vadd.f32 0.0, %v1095
    %v1097 = vpop.f32.mrb[0].mxu0
    %1098 = vmatprep.mubr.f32.mxu0 0.0
    %1099 = vmatmul.mubr.f32.gmra.mrb[0].mxu0 %v919
    %v1100 = vpop.f32.mrb[0].mxu0
    %v1101 = vadd.f32 0.0, %v1100
    %v1102 = vpop.f32.mrb[0].mxu0
    %1103 = vmatprep.mubr.f32.mxu0 0.0
    %1104 = vmatmul.mubr.f32.gmra.mrb[0].mxu0 %v922
    %v1105 = vpop.f32.mrb[0].mxu0
    %v1106 = vadd.f32 0.0, %v1105
    %v1107 = vpop.f32.mrb[0].mxu0
    %1108 = vmatprep.mubr.f32.mxu0 0.0
    %1109 = vmatmul.mubr.f32.gmra.mrb[0].mxu0 %v925
    %v1110 = vpop.f32.mrb[0].mxu0
    %v1111 = vadd.f32 0.0, %v1110
    %v1112 = vpop.f32.mrb[0].mxu0
    %1113 = vmatprep.mubr.f32.mxu0 0.0
    %1114 = vmatmul.mubr.f32.gmra.mrb[0].mxu0 %v928
    %v1115 = vpop.f32.mrb[0].mxu0
    %v1116 = vadd.f32 0.0, %v1115
    %v1117 = vpop.f32.mrb[0].mxu0
    %1118 = vmatprep.mubr.f32.mxu0 0.0
    %1119 = vmatmul.mubr.f32.gmra.mrb[0].mxu0 %v931
    %v1120 = vpop.f32.mrb[0].mxu0
    %v1121 = vadd.f32 0.0, %v1120
    %v1122 = vpop.f32.mrb[0].mxu0
    %1123 = vmatprep.mubr.f32.mxu0 0.0
    %1124 = vmatmul.mubr.f32.gmra.mrb[0].mxu0 %v934
    %v1125 = vpop.f32.mrb[0].mxu0
    %v1126 = vadd.f32 0.0, %v1125
    %v1127 = vpop.f32.mrb[0].mxu0
    %1128 = vmatprep.mubr.f32.mxu0 0.0
    %1129 = vmatmul.mubr.f32.gmra.mrb[0].mxu0 %v937
    %v1130 = vpop.f32.mrb[0].mxu0
    %v1131 = vadd.f32 0.0, %v1130
    %v1132 = vpop.f32.mrb[0].mxu0
    %1133 = vmatprep.mubr.f32.mxu0 0.0
    %1134 = vmatmul.mubr.f32.gmra.mrb[0].mxu0 %v940
    %v1135 = vpop.f32.mrb[0].mxu0
    %v1136 = vadd.f32 0.0, %v1135
    %v1137 = vpop.f32.mrb[0].mxu0
    %1138 = vmatprep.mubr.f32.mxu0 0.0
    %1139 = vmatmul.mubr.f32.gmra.mrb[0].mxu0 %v943
    %v1140 = vpop.f32.mrb[0].mxu0
    %v1141 = vadd.f32 0.0, %v1140
    %v1142 = vpop.f32.mrb[0].mxu0
    %1143 = vmatprep.mubr.f32.mxu0 0.0
    %1144 = vmatmul.mubr.f32.gmra.mrb[0].mxu0 %v946
    %v1145 = vpop.f32.mrb[0].mxu0
    %v1146 = vadd.f32 0.0, %v1145
    %v1147 = vpop.f32.mrb[0].mxu0
    %1148 = vmatprep.mubr.f32.mxu0 0.0
    %1149 = vmatmul.mubr.f32.gmra.mrb[0].mxu0 %v949
    %v1150 = vpop.f32.mrb[0].mxu0
    %v1151 = vadd.f32 0.0, %v1150
    %v1152 = vpop.f32.mrb[0].mxu0
    %1153 = vmatprep.mubr.f32.mxu0 0.0
    %1154 = vmatmul.mubr.f32.gmra.mrb[0].mxu0 %v952
    %v1155 = vpop.f32.mrb[0].mxu0
    %v1156 = vadd.f32 0.0, %v1155
    %v1157 = vpop.f32.mrb[0].mxu0
    %1158 = vmatprep.mubr.f32.mxu0 0.0
    %1159 = vmatmul.mubr.f32.gmra.mrb[0].mxu0 %v955
    %v1160 = vpop.f32.mrb[0].mxu0
    %v1161 = vadd.f32 0.0, %v1160
    %v1162 = vpop.f32.mrb[0].mxu0
    %1163 = vmatprep.mubr.f32.mxu0 0.0
    %1164 = vmatmul.mubr.f32.gmra.mrb[0].mxu0 %v958
    %v1165 = vpop.f32.mrb[0].mxu0
    %v1166 = vadd.f32 0.0, %v1165
    %v1167 = vpop.f32.mrb[0].mxu0
    %1168 = vmatprep.mubr.f32.mxu0 0.0
    %1169 = vmatmul.mubr.f32.gmra.mrb[0].mxu0 %v961
    %v1170 = vpop.f32.mrb[0].mxu0
    %v1171 = vadd.f32 0.0, %v1170
    %v1172 = vpop.f32.mrb[0].mxu0
    %1173 = vmatprep.mubr.f32.mxu0 0.0
    %1174 = vmatmul.mubr.f32.gmra.mrb[0].mxu0 %v964
    %v1175 = vpop.f32.mrb[0].mxu0
    %v1176 = vadd.f32 0.0, %v1175
    %v1177 = vpop.f32.mrb[0].mxu0
    %1178 = vmatprep.mubr.f32.mxu0 0.0
    %1179 = vmatmul.mubr.f32.gmra.mrb[0].mxu0 %v967
    %v1180 = vpop.f32.mrb[0].mxu0
    %v1181 = vadd.f32 0.0, %v1180
    %v1182 = vpop.f32.mrb[0].mxu0
    %1183 = vmatprep.mubr.f32.mxu0 0.0
    %1184 = vmatmul.mubr.f32.gmra.mrb[0].mxu0 %v970
    %v1185 = vpop.f32.mrb[0].mxu0
    %v1186 = vadd.f32 0.0, %v1185
    %v1187 = vpop.f32.mrb[0].mxu0
    %1188 = vmatprep.mubr.f32.mxu0 0.0
    %1189 = vmatmul.mubr.f32.gmra.mrb[0].mxu0 %v973
    %v1190 = vpop.f32.mrb[0].mxu0
    %v1191 = vadd.f32 0.0, %v1190
    %v1192 = vpop.f32.mrb[0].mxu0
    %1193 = vmatprep.mubr.f32.mxu0 0.0
    %1194 = vmatmul.mubr.f32.gmra.mrb[0].mxu0 %v976
    %v1195 = vpop.f32.mrb[0].mxu0
    %v1196 = vadd.f32 0.0, %v1195
    %v1197 = vpop.f32.mrb[0].mxu0
    %1198 = vmatprep.mubr.f32.mxu0 0.0
    %1199 = vmatmul.mubr.f32.gmra.mrb[0].mxu0 %v979
    %v1200 = vpop.f32.mrb[0].mxu0
    %v1201 = vadd.f32 0.0, %v1200
    %v1202 = vpop.f32.mrb[0].mxu0
    %1203 = vmatprep.mubr.f32.mxu0 0.0
    %1204 = vmatmul.mubr.f32.gmra.mrb[0].mxu0 %v982
    %v1205 = vpop.f32.mrb[0].mxu0
    %v1206 = vadd.f32 0.0, %v1205
    %v1207 = vpop.f32.mrb[0].mxu0
    %1208 = vdwg.mxu0
    %v1209 = vpack.c.bf16 %v1056, %v1051
    %v1210 = vpack.c.bf16 %v1066, %v1061
    %v1211 = vpack.c.bf16 %v1076, %v1071
    %v1212 = vpack.c.bf16 %v1086, %v1081
    %v1213 = vpack.c.bf16 %v1096, %v1091
    %v1214 = vpack.c.bf16 %v1106, %v1101
    %v1215 = vpack.c.bf16 %v1116, %v1111
    %v1216 = vpack.c.bf16 %v1126, %v1121
    %v1217 = vpack.c.bf16 %v1136, %v1131
    %v1218 = vpack.c.bf16 %v1146, %v1141
    %v1219 = vpack.c.bf16 %v1156, %v1151
    %v1220 = vpack.c.bf16 %v1166, %v1161
    %v1221 = vpack.c.bf16 %v1176, %v1171
    %v1222 = vpack.c.bf16 %v1186, %v1181
    %v1223 = vpack.c.bf16 %v1196, %v1191
    %v1224 = vpack.c.bf16 %v1206, %v1201
    %v1225 = vld [vmem:[%s5] sm:$0x1]
    %v1227 = vlaneseq
    %v1228 = vshrl.u32 %v1227, 7
    %v1229 = vsub.s32 0, %v1228
    %v1230 = vrot.slane %v1225, %v1229
    %1232 = vmatprep.subr.bf16.mxu0 0
    %1233 = vmatpush1.bf16.msra.mxu0 %v1209
    %1234 = vmatprep.subr.bf16.mxu0 0
    %1235 = vmatpush1.bf16.msra.mxu0 %v1210
    %1236 = vmatprep.subr.bf16.mxu0 0
    %1237 = vmatpush1.bf16.msra.mxu0 %v1211
    %1238 = vmatprep.subr.bf16.mxu0 0
    %1239 = vmatpush1.bf16.msra.mxu0 %v1212
    %1240 = vmatprep.subr.bf16.mxu0 0
    %1241 = vmatpush1.bf16.msra.mxu0 %v1213
    %1242 = vmatprep.subr.bf16.mxu0 0
    %1243 = vmatpush1.bf16.msra.mxu0 %v1214
    %1244 = vmatprep.subr.bf16.mxu0 0
    %1245 = vmatpush1.bf16.msra.mxu0 %v1215
    %1246 = vmatprep.subr.bf16.mxu0 0
    %1247 = vmatpush1.bf16.msra.mxu0 %v1216
    %1248 = vmatprep.subr.bf16.mxu0 0
    %1249 = vmatpush1.bf16.msra.mxu0 %v1217
    %1250 = vmatprep.subr.bf16.mxu0 0
    %1251 = vmatpush1.bf16.msra.mxu0 %v1218
    %1252 = vmatprep.subr.bf16.mxu0 0
    %1253 = vmatpush1.bf16.msra.mxu0 %v1219
    %1254 = vmatprep.subr.bf16.mxu0 0
    %1255 = vmatpush1.bf16.msra.mxu0 %v1220
    %1256 = vmatprep.subr.bf16.mxu0 0
    %1257 = vmatpush1.bf16.msra.mxu0 %v1221
    %1258 = vmatprep.subr.bf16.mxu0 0
    %1259 = vmatpush1.bf16.msra.mxu0 %v1222
    %1260 = vmatprep.subr.bf16.mxu0 0
    %1261 = vmatpush1.bf16.msra.mxu0 %v1223
    %1262 = vmatprep.subr.bf16.mxu0 0
    %1263 = vmatpush1.bf16.msra.mxu0 %v1224
    %1264 = vmatprep.mubr.bf16.mxu0 %v200
    %1265 = vmatmul.mubr.bf16.gmra.mrb[0].mxu0 %v199
    %v1266 = vpop.f32.mrb[0].mxu0
    %v1267 = vadd.f32 %v1230, %v1266
    %v1268 = vpop.f32.mrb[0].mxu0
    %v1269 = vpop.f32.mrb[0].mxu0
    %v1270 = vadd.f32 %v1230, %v1269
    %v1271 = vpop.f32.mrb[0].mxu0
    %1272 = vmatprep.mubr.bf16.mxu0 %v202
    %1273 = vmatmul.mubr.bf16.gmra.mrb[0].mxu0 %v201
    %v1274 = vpop.f32.mrb[0].mxu0
    %v1275 = vadd.f32 %v1230, %v1274
    %v1276 = vpop.f32.mrb[0].mxu0
    %v1277 = vpop.f32.mrb[0].mxu0
    %v1278 = vadd.f32 %v1230, %v1277
    %v1279 = vpop.f32.mrb[0].mxu0
    %1280 = vmatprep.mubr.bf16.mxu0 %v204
    %1281 = vmatmul.mubr.bf16.gmra.mrb[0].mxu0 %v203
    %v1282 = vpop.f32.mrb[0].mxu0
    %v1283 = vadd.f32 %v1230, %v1282
    %v1284 = vpop.f32.mrb[0].mxu0
    %v1285 = vpop.f32.mrb[0].mxu0
    %v1286 = vadd.f32 %v1230, %v1285
    %v1287 = vpop.f32.mrb[0].mxu0
    %1288 = vmatprep.mubr.bf16.mxu0 %v206
    %1289 = vmatmul.mubr.bf16.gmra.mrb[0].mxu0 %v205
    %v1290 = vpop.f32.mrb[0].mxu0
    %v1291 = vadd.f32 %v1230, %v1290
    %v1292 = vpop.f32.mrb[0].mxu0
    %v1293 = vpop.f32.mrb[0].mxu0
    %v1294 = vadd.f32 %v1230, %v1293
    %v1295 = vpop.f32.mrb[0].mxu0
    %1296 = vmatprep.mubr.bf16.mxu0 %v208
    %1297 = vmatmul.mubr.bf16.gmra.mrb[0].mxu0 %v207
    %v1298 = vpop.f32.mrb[0].mxu0
    %v1299 = vadd.f32 %v1230, %v1298
    %v1300 = vpop.f32.mrb[0].mxu0
    %v1301 = vpop.f32.mrb[0].mxu0
    %v1302 = vadd.f32 %v1230, %v1301
    %v1303 = vpop.f32.mrb[0].mxu0
    %1304 = vmatprep.mubr.bf16.mxu0 %v210
    %1305 = vmatmul.mubr.bf16.gmra.mrb[0].mxu0 %v209
    %v1306 = vpop.f32.mrb[0].mxu0
    %v1307 = vadd.f32 %v1230, %v1306
    %v1308 = vpop.f32.mrb[0].mxu0
    %v1309 = vpop.f32.mrb[0].mxu0
    %v1310 = vadd.f32 %v1230, %v1309
    %v1311 = vpop.f32.mrb[0].mxu0
    %1312 = vmatprep.mubr.bf16.mxu0 %v212
    %1313 = vmatmul.mubr.bf16.gmra.mrb[0].mxu0 %v211
    %v1314 = vpop.f32.mrb[0].mxu0
    %v1315 = vadd.f32 %v1230, %v1314
    %v1316 = vpop.f32.mrb[0].mxu0
    %v1317 = vpop.f32.mrb[0].mxu0
    %v1318 = vadd.f32 %v1230, %v1317
    %v1319 = vpop.f32.mrb[0].mxu0
    %1320 = vmatprep.mubr.bf16.mxu0 %v214
    %1321 = vmatmul.mubr.bf16.gmra.mrb[0].mxu0 %v213
    %v1322 = vpop.f32.mrb[0].mxu0
    %v1323 = vadd.f32 %v1230, %v1322
    %v1324 = vpop.f32.mrb[0].mxu0
    %v1325 = vpop.f32.mrb[0].mxu0
    %v1326 = vadd.f32 %v1230, %v1325
    %v1327 = vpop.f32.mrb[0].mxu0
    %1328 = vmatprep.mubr.bf16.mxu0 %v216
    %1329 = vmatmul.mubr.bf16.gmra.mrb[0].mxu0 %v215
    %v1330 = vpop.f32.mrb[0].mxu0
    %v1331 = vadd.f32 %v1230, %v1330
    %v1332 = vpop.f32.mrb[0].mxu0
    %v1333 = vpop.f32.mrb[0].mxu0
    %v1334 = vadd.f32 %v1230, %v1333
    %v1335 = vpop.f32.mrb[0].mxu0
    %1336 = vmatprep.mubr.bf16.mxu0 %v218
    %1337 = vmatmul.mubr.bf16.gmra.mrb[0].mxu0 %v217
    %v1338 = vpop.f32.mrb[0].mxu0
    %v1339 = vadd.f32 %v1230, %v1338
    %v1340 = vpop.f32.mrb[0].mxu0
    %v1341 = vpop.f32.mrb[0].mxu0
    %v1342 = vadd.f32 %v1230, %v1341
    %v1343 = vpop.f32.mrb[0].mxu0
    %1344 = vmatprep.mubr.bf16.mxu0 %v220
    %1345 = vmatmul.mubr.bf16.gmra.mrb[0].mxu0 %v219
    %v1346 = vpop.f32.mrb[0].mxu0
    %v1347 = vadd.f32 %v1230, %v1346
    %v1348 = vpop.f32.mrb[0].mxu0
    %v1349 = vpop.f32.mrb[0].mxu0
    %v1350 = vadd.f32 %v1230, %v1349
    %v1351 = vpop.f32.mrb[0].mxu0
    %1352 = vmatprep.mubr.bf16.mxu0 %v222
    %1353 = vmatmul.mubr.bf16.gmra.mrb[0].mxu0 %v221
    %v1354 = vpop.f32.mrb[0].mxu0
    %v1355 = vadd.f32 %v1230, %v1354
    %v1356 = vpop.f32.mrb[0].mxu0
    %v1357 = vpop.f32.mrb[0].mxu0
    %v1358 = vadd.f32 %v1230, %v1357
    %v1359 = vpop.f32.mrb[0].mxu0
    %1360 = vmatprep.mubr.bf16.mxu0 %v224
    %1361 = vmatmul.mubr.bf16.gmra.mrb[0].mxu0 %v223
    %v1362 = vpop.f32.mrb[0].mxu0
    %v1363 = vadd.f32 %v1230, %v1362
    %v1364 = vpop.f32.mrb[0].mxu0
    %v1365 = vpop.f32.mrb[0].mxu0
    %v1366 = vadd.f32 %v1230, %v1365
    %v1367 = vpop.f32.mrb[0].mxu0
    %1368 = vmatprep.mubr.bf16.mxu0 %v226
    %1369 = vmatmul.mubr.bf16.gmra.mrb[0].mxu0 %v225
    %v1370 = vpop.f32.mrb[0].mxu0
    %v1371 = vadd.f32 %v1230, %v1370
    %v1372 = vpop.f32.mrb[0].mxu0
    %v1373 = vpop.f32.mrb[0].mxu0
    %v1374 = vadd.f32 %v1230, %v1373
    %v1375 = vpop.f32.mrb[0].mxu0
    %1376 = vmatprep.mubr.bf16.mxu0 %v228
    %1377 = vmatmul.mubr.bf16.gmra.mrb[0].mxu0 %v227
    %v1378 = vpop.f32.mrb[0].mxu0
    %v1379 = vadd.f32 %v1230, %v1378
    %v1380 = vpop.f32.mrb[0].mxu0
    %v1381 = vpop.f32.mrb[0].mxu0
    %v1382 = vadd.f32 %v1230, %v1381
    %v1383 = vpop.f32.mrb[0].mxu0
    %1384 = vmatprep.mubr.bf16.mxu0 %v230
    %1385 = vmatmul.mubr.bf16.gmra.mrb[0].mxu0 %v229
    %v1386 = vpop.f32.mrb[0].mxu0
    %v1387 = vadd.f32 %v1230, %v1386
    %v1388 = vpop.f32.mrb[0].mxu0
    %v1389 = vpop.f32.mrb[0].mxu0
    %v1390 = vadd.f32 %v1230, %v1389
    %v1391 = vpop.f32.mrb[0].mxu0
    %1392 = vdwg.mxu0
    %1393 = vst [vmem:[#allocation5] sm:$0xff] %v1267
    %1394 = vst [vmem:[#allocation5 + $0x8] sm:$0xff] %v1270
    %1395 = vst [vmem:[#allocation5 + $0x10] sm:$0xff] %v1275
    %1396 = vst [vmem:[#allocation5 + $0x18] sm:$0xff] %v1278
    %1397 = vst [vmem:[#allocation5 + $0x20] sm:$0xff] %v1283
    %1398 = vst [vmem:[#allocation5 + $0x28] sm:$0xff] %v1286
    %1399 = vst [vmem:[#allocation5 + $0x30] sm:$0xff] %v1291
    %1400 = vst [vmem:[#allocation5 + $0x38] sm:$0xff] %v1294
    %1401 = vst [vmem:[#allocation5 + $0x40] sm:$0xff] %v1299
    %1402 = vst [vmem:[#allocation5 + $0x48] sm:$0xff] %v1302
    %1403 = vst [vmem:[#allocation5 + $0x50] sm:$0xff] %v1307
    %1404 = vst [vmem:[#allocation5 + $0x58] sm:$0xff] %v1310
    %1405 = vst [vmem:[#allocation5 + $0x60] sm:$0xff] %v1315
    %1406 = vst [vmem:[#allocation5 + $0x68] sm:$0xff] %v1318
    %1407 = vst [vmem:[#allocation5 + $0x70] sm:$0xff] %v1323
    %1408 = vst [vmem:[#allocation5 + $0x78] sm:$0xff] %v1326
    %1409 = vst [vmem:[#allocation5 + $0x80] sm:$0xff] %v1331
    %1410 = vst [vmem:[#allocation5 + $0x88] sm:$0xff] %v1334
    %1411 = vst [vmem:[#allocation5 + $0x90] sm:$0xff] %v1339
    %1412 = vst [vmem:[#allocation5 + $0x98] sm:$0xff] %v1342
    %1413 = vst [vmem:[#allocation5 + $0xa0] sm:$0xff] %v1347
    %1414 = vst [vmem:[#allocation5 + $0xa8] sm:$0xff] %v1350
    %1415 = vst [vmem:[#allocation5 + $0xb0] sm:$0xff] %v1355
    %1416 = vst [vmem:[#allocation5 + $0xb8] sm:$0xff] %v1358
    %1417 = vst [vmem:[#allocation5 + $0xc0] sm:$0xff] %v1363
    %1418 = vst [vmem:[#allocation5 + $0xc8] sm:$0xff] %v1366
    %1419 = vst [vmem:[#allocation5 + $0xd0] sm:$0xff] %v1371
    %1420 = vst [vmem:[#allocation5 + $0xd8] sm:$0xff] %v1374
    %1421 = vst [vmem:[#allocation5 + $0xe0] sm:$0xff] %v1379
    %1422 = vst [vmem:[#allocation5 + $0xe8] sm:$0xff] %v1382
    %1423 = vst [vmem:[#allocation5 + $0xf0] sm:$0xff] %v1387
    %1424 = vst [vmem:[#allocation5 + $0xf8] sm:$0xff] %v1390
    // Predicated region
    $region30: #{tpu_custom_call.1} parent=1 // pred_check
      _
    $region31: #{tpu_custom_call.1} parent=1 // pred_check_branch
      %1426 = sbr.rel (0) target = $region33
    $region32: #{tpu_custom_call.1} parent=1 // pred_region
      %s1428 = ssub.s32 4096, 4096
      %1429 = vsyncadd [#allocation4], %s1428
      %s1430 = sshll.u32 [#allocation5], 4
      %s1431 = int_to_ptr.vmem [resolvable:$true] %s1430
      %1436 = dma.vmem_to_hbm [thread:$0]  %s1431, 4096, %s6, [#allocation4], 128, 128, 8
    $region33: #{tpu_custom_call.1} parent=1 // pred_fallthru
      _
    // Predicated region
    $region34: #{tpu_custom_call.1} parent=1 // pred_check
      _
    $region35: #{tpu_custom_call.1} parent=1 // pred_check_branch
      %1438 = sbr.rel (0) target = $region37
    $region36: #{tpu_custom_call.1} parent=1 // pred_region
      %1439 = dma.done [#allocation4], 4096
    $region37: #{tpu_custom_call.1} parent=1 // pred_fallthru
      _
    %1440 = vsyncpa [#allocation3], 1
    %1441 = vsyncpa [#allocation4], 1

</llo_original>
